<compile_context>
chip_gen: v6e
topology: v6e:2x2x1
jax: 0.10.0
libtpu: 0.0.40
codegen_flags: <defaults>
</compile_context>

<pallas_src>
import jax
import jax.numpy as jnp
from jax import lax
from jax.experimental import pallas as pl
from jax.experimental.pallas import tpu as pltpu

EPS = 1e-5


def cbn_apply_kernel(stats_ref, betas_ref, gammas_ref, feat_ref, out_ref):
    """Per-tile: normalize, per-(batch,channel) affine, channel-softmax gate.

    stats_ref : SMEM (2,)               [mean, inv_std]
    betas_ref : VMEM (1, C, 1, 1)       this batch's betas
    gammas_ref: VMEM (1, C, 1, 1)       this batch's gammas
    feat_ref  : VMEM (1, C, TS, 128)    spatial on (sublane, lane) -> fully packed
    """
    mean = stats_ref[0]
    inv_std = stats_ref[1]

    feat = feat_ref[...]
    norm = (feat - mean) * inv_std                      # multiply, not divide
    out = norm * gammas_ref[...] + betas_ref[...]       # per-(b,c) scalar splat

    # softmax over channels (torch dim=1): C is a major block axis here, so the
    # reduce is an unrolled elementwise max/add over C fully-packed vregs (VALU).
    m = jnp.max(out, axis=1, keepdims=True)             # (1, 1, TS, 128)
    e = jnp.exp(out - m)
    den = jnp.sum(e, axis=1, keepdims=True)             # (1, 1, TS, 128)
    r = pl.reciprocal(den, approx=True)                 # EUP slot, not VALU divide
    r = r * (2.0 - den * r)                             # one Newton step -> ~f32 exact
    out_ref[...] = out * (e * r)


def _cdiv(a, b):
    return -(-a // b)


def _vmem_capacity_bytes():
    try:
        return int(pltpu.get_tpu_info().vmem_capacity_bytes)
    except Exception:
        return 64 * 1024 * 1024            # conservative fallback: v7x per-TC VMEM


def _spatial_tiling(S, channels, target_bytes):
    """Pick (ts, n_tiles): ts = number of 128-lane rows per block of the
    (B, C, rows, 128) view.  Block f32 footprint (in + out, double-buffered)
    is ~16 * C * ts * 128 bytes; there is no sublane padding because ts is a
    multiple of 8 (or spans the full rows dim)."""
    rows = _cdiv(S, 128)
    budget_rows = max(8, (target_bytes // (16 * max(channels, 1) * 128)) // 8 * 8)
    if rows <= budget_rows:
        return rows, 1                     # single block spans the full rows dim
    ts = budget_rows
    return ts, _cdiv(rows, ts)


def cbn_forward(feature_nchw, ir_emb, params):
    """feature_nchw: (B, C, H, W) f32, ir_emb: (B, IR) f32.
    Returns (out (B,C,H,W), ir_emb), matching CBN.forward."""
    B, C, H, W = feature_nchw.shape
    S = H * W
    feat = feature_nchw.reshape(B, C, S)       # free reshape, no NCHW<->NHWC transpose

    # ---- conditioning: betas/gammas = base + fc(ir) (plain XLA, tiny MLPs) ----
    relu = lambda x: jnp.maximum(x, 0.0)
    db = relu(ir_emb @ params["w1b"] + params["b1b"]) @ params["w2b"] + params["b2b"]
    dg = relu(ir_emb @ params["w1g"] + params["b1g"]) @ params["w2g"] + params["b2g"]
    betas4 = (params["betas"] + db).reshape(B, C, 1, 1)
    gammas4 = (params["gammas"] + dg).reshape(B, C, 1, 1)

    # ---- whole-tensor stats (torch.mean / unbiased torch.var), one HBM pass ---
    # sum(x) and sum(x*x) share the input and fuse into a single multi-output
    # XLA reduction; the apply kernel below is the second and final read of feat.
    n = feat.size
    s1 = jnp.sum(feat)
    s2 = jnp.sum(feat * feat)
    mean = s1 / n
    var = jnp.maximum((s2 - s1 * s1 / n) / (n - 1), 0.0)   # guard cancellation
    inv_std = lax.rsqrt(var + EPS)
    stats = jnp.stack([mean, inv_std]).astype(jnp.float32)  # (2,) -> SMEM scalars

    # ---- tiling / padding (chip-aware VMEM budget) ----------------------------
    vmem_cap = _vmem_capacity_bytes()
    if vmem_cap >= 100 * 1024 * 1024:          # 128 MiB parts (v5e / v6e)
        target_bytes, vmem_limit = 24 * 1024 * 1024, 64 * 1024 * 1024
    else:                                       # 64 MiB per-TC parts (v7x)
        target_bytes, vmem_limit = 8 * 1024 * 1024, 48 * 1024 * 1024

    ts, n_tiles = _spatial_tiling(S, C, target_bytes)
    if B == 1 and n_tiles == 1 and ts >= 16:    # keep both v7x TensorCores busy
        ts = _cdiv(_cdiv(ts, 2), 8) * 8
        n_tiles = 2
    rows_pad = ts * n_tiles
    S_pad = rows_pad * 128

    feat_p = feat if S_pad == S else jnp.pad(feat, ((0, 0), (0, 0), (0, S_pad - S)))
    feat_p = feat_p.reshape(B, C, rows_pad, 128)   # free: row-major split of S

    out = pl.pallas_call(
        cbn_apply_kernel,
        out_shape=jax.ShapeDtypeStruct((B, C, rows_pad, 128), jnp.float32),
        grid_spec=pltpu.PrefetchScalarGridSpec(
            num_scalar_prefetch=0,
            grid=(B, n_tiles),
            in_specs=[
                pl.BlockSpec(memory_space=pltpu.MemorySpace.SMEM),           # stats
                pl.BlockSpec((1, C, 1, 1), lambda b, s: (b, 0, 0, 0)),       # betas
                pl.BlockSpec((1, C, 1, 1), lambda b, s: (b, 0, 0, 0)),       # gammas
                pl.BlockSpec((1, C, ts, 128), lambda b, s: (b, 0, s, 0)),    # feat
            ],
            out_specs=pl.BlockSpec((1, C, ts, 128), lambda b, s: (b, 0, s, 0)),
        ),
        compiler_params=pltpu.CompilerParams(
            dimension_semantics=("parallel", "parallel"),
            vmem_limit_bytes=vmem_limit,
        ),
    )(stats, betas4, gammas4, feat_p)

    out = out.reshape(B, C, S_pad)[:, :, :S].reshape(B, C, H, W)
    return out, ir_emb


def xavier_uniform(key, fan_in, fan_out):
    limit = jnp.sqrt(6.0 / (fan_in + fan_out))
    return jax.random.uniform(key, (fan_in, fan_out), jnp.float32, -limit, limit)


def init_params(key, ir_size, emb_size, out_size, batch_size, channels):
    k = jax.random.split(key, 4)
    return {
        # fc_beta
        "w1b": xavier_uniform(k[0], ir_size, emb_size),
        "b1b": jnp.full((1, emb_size), 0.1, jnp.float32),
        "w2b": xavier_uniform(k[1], emb_size, out_size),
        "b2b": jnp.full((1, out_size), 0.1, jnp.float32),
        # fc_gamma
        "w1g": xavier_uniform(k[2], ir_size, emb_size),
        "b1g": jnp.full((1, emb_size), 0.1, jnp.float32),
        "w2g": xavier_uniform(k[3], emb_size, out_size),
        "b2g": jnp.full((1, out_size), 0.1, jnp.float32),
        # learned base betas / gammas (tied to batch size, as in the reference)
        "betas": jnp.zeros((batch_size, channels), jnp.float32),
        "gammas": jnp.ones((batch_size, channels), jnp.float32),
    }


def cbn_reference(feature, ir_emb, params):
    """Pure-JAX reference mirroring the PyTorch forward (two-pass stats)."""
    relu = lambda x: jnp.maximum(x, 0.0)
    db = relu(ir_emb @ params["w1b"] + params["b1b"]) @ params["w2b"] + params["b2b"]
    dg = relu(ir_emb @ params["w1g"] + params["b1g"]) @ params["w2g"] + params["b2g"]
    betas = params["betas"] + db
    gammas = params["gammas"] + dg
    mean = jnp.mean(feature)
    var = jnp.sum((feature - mean) ** 2) / (feature.size - 1)
    norm = (feature - mean) / jnp.sqrt(var + EPS)
    out = norm * gammas[:, :, None, None] + betas[:, :, None, None]
    sm = jax.nn.softmax(out, axis=1)
    return out * sm


if __name__ == "__main__":
    # Small, module-consistent shapes
    B, C, H, W = 2, 4, 16, 16
    IR_SIZE, EMB_SIZE, OUT_SIZE = 32, 32, C  # out_size must equal channels

    key = jax.random.PRNGKey(0)
    k_feat, k_ir, k_params = jax.random.split(key, 3)

    feature = jax.random.normal(k_feat, (B, C, H, W), jnp.float32)
    ir_emb = jax.random.normal(k_ir, (B, IR_SIZE), jnp.float32)
    params = init_params(k_params, IR_SIZE, EMB_SIZE, OUT_SIZE, B, C)

    out, ir_out = jax.jit(cbn_forward)(feature, ir_emb, params)
    out = jax.block_until_ready(out)

    ref = jax.block_until_ready(cbn_reference(feature, ir_emb, params))
    assert out.shape == (B, C, H, W)
    assert jnp.allclose(out, ref, atol=1e-3, rtol=1e-3), "mismatch vs reference"
    assert jnp.array_equal(ir_out, ir_emb)

    print("KERNEL_OK")
</pallas_src>

<mosaic_0001>
module attributes {stable_mosaic.version = 11 : i64} {
  func.func @cbn_apply_kernel(%arg0: i32, %arg1: i32, %arg2: memref<2xf32, #tpu.memory_space<smem>>, %arg3: memref<1x4x1x1xf32, #tpu.memory_space<vmem>>, %arg4: memref<1x4x1x1xf32, #tpu.memory_space<vmem>>, %arg5: memref<1x4x2x128xf32, #tpu.memory_space<vmem>>, %arg6: memref<1x4x2x128xf32, #tpu.memory_space<vmem>>) attributes {dimension_semantics = [#tpu.dimension_semantics<parallel>, #tpu.dimension_semantics<parallel>], iteration_bounds = array<i64: 2, 1>, scalar_prefetch = 0 : i64, scratch_operands = 0 : i64, tpu.core_type = #tpu.core_type<tc>, window_params = [{transform_indices = @transform_0, window_bounds = array<i64: 2>}, {transform_indices = @transform_1, window_bounds = array<i64: 1, 4, 1, 1>}, {transform_indices = @transform_2, window_bounds = array<i64: 1, 4, 1, 1>}, {transform_indices = @transform_3, window_bounds = array<i64: 1, 4, 2, 128>}, {transform_indices = @transform_4, window_bounds = array<i64: 1, 4, 2, 128>}]} {
    %c0 = arith.constant 0 : index
    %0 = memref.load %arg2[%c0] : memref<2xf32, #tpu.memory_space<smem>>
    %c1 = arith.constant 1 : index
    %1 = memref.load %arg2[%c1] : memref<2xf32, #tpu.memory_space<smem>>
    %c0_0 = arith.constant 0 : index
    %c0_1 = arith.constant 0 : index
    %c0_2 = arith.constant 0 : index
    %c0_3 = arith.constant 0 : index
    %2 = vector.load %arg5[%c0_0, %c0_1, %c0_2, %c0_3] : memref<1x4x2x128xf32, #tpu.memory_space<vmem>>, vector<1x4x2x128xf32>
    %3 = vector.broadcast %0 : f32 to vector<1x4x2x128xf32>
    %4 = arith.subf %2, %3 : vector<1x4x2x128xf32>
    %5 = vector.broadcast %1 : f32 to vector<1x4x2x128xf32>
    %6 = arith.mulf %4, %5 : vector<1x4x2x128xf32>
    %c0_4 = arith.constant 0 : index
    %c0_5 = arith.constant 0 : index
    %c0_6 = arith.constant 0 : index
    %c0_7 = arith.constant 0 : index
    %7 = vector.load %arg4[%c0_4, %c0_5, %c0_6, %c0_7] : memref<1x4x1x1xf32, #tpu.memory_space<vmem>>, vector<1x4x1x1xf32>
    %8 = vector.broadcast %7 : vector<1x4x1x1xf32> to vector<1x4x2x128xf32>
    %9 = arith.mulf %6, %8 : vector<1x4x2x128xf32>
    %c0_8 = arith.constant 0 : index
    %c0_9 = arith.constant 0 : index
    %c0_10 = arith.constant 0 : index
    %c0_11 = arith.constant 0 : index
    %10 = vector.load %arg3[%c0_8, %c0_9, %c0_10, %c0_11] : memref<1x4x1x1xf32, #tpu.memory_space<vmem>>, vector<1x4x1x1xf32>
    %11 = vector.broadcast %10 : vector<1x4x1x1xf32> to vector<1x4x2x128xf32>
    %12 = arith.addf %9, %11 : vector<1x4x2x128xf32>
    %cst = arith.constant dense<0xFF800000> : vector<1x2x128xf32>
    %13 = vector.multi_reduction <maximumf>, %12, %cst [1] : vector<1x4x2x128xf32> to vector<1x2x128xf32>
    %14 = vector.shape_cast %13 : vector<1x2x128xf32> to vector<1x1x2x128xf32>
    %15 = vector.broadcast %14 : vector<1x1x2x128xf32> to vector<1x4x2x128xf32>
    %16 = arith.subf %12, %15 : vector<1x4x2x128xf32>
    %17 = math.exp %16 : vector<1x4x2x128xf32>
    %cst_12 = arith.constant dense<0.000000e+00> : vector<1x2x128xf32>
    %18 = vector.multi_reduction <add>, %17, %cst_12 [1] : vector<1x4x2x128xf32> to vector<1x2x128xf32>
    %19 = vector.shape_cast %18 : vector<1x2x128xf32> to vector<1x1x2x128xf32>
    %20 = tpu.reciprocal %19 {approx = true} : vector<1x1x2x128xf32> -> vector<1x1x2x128xf32>
    %21 = arith.mulf %19, %20 : vector<1x1x2x128xf32>
    %cst_13 = arith.constant 2.000000e+00 : f32
    %22 = vector.broadcast %cst_13 : f32 to vector<1x1x2x128xf32>
    %23 = arith.subf %22, %21 : vector<1x1x2x128xf32>
    %24 = arith.mulf %20, %23 : vector<1x1x2x128xf32>
    %25 = vector.broadcast %24 : vector<1x1x2x128xf32> to vector<1x4x2x128xf32>
    %26 = arith.mulf %17, %25 : vector<1x4x2x128xf32>
    %27 = arith.mulf %12, %26 : vector<1x4x2x128xf32>
    %c0_14 = arith.constant 0 : index
    %c0_15 = arith.constant 0 : index
    %c0_16 = arith.constant 0 : index
    %c0_17 = arith.constant 0 : index
    %28 = vector.load %arg6[%c0_14, %c0_15, %c0_16, %c0_17] : memref<1x4x2x128xf32, #tpu.memory_space<vmem>>, vector<1x4x2x128xf32>
    tpu.vector_store %arg6[%c0_14, %c0_15, %c0_16, %c0_17], %27 {strides = array<i32>} : memref<1x4x2x128xf32, #tpu.memory_space<vmem>>, vector<1x4x2x128xf32>,
    return
  }
  func.func @transform_0(%arg0: i32, %arg1: i32) -> i32 {
    %c0_i32 = arith.constant 0 : i32
    %c0_i32_0 = arith.constant 0 : i32
    return %c0_i32 : i32
  }
  func.func @transform_1(%arg0: i32, %arg1: i32) -> (i32, i32, i32, i32) {
    %c0_i32 = arith.constant 0 : i32
    %c0_i32_0 = arith.constant 0 : i32
    %c0_i32_1 = arith.constant 0 : i32
    %c0_i32_2 = arith.constant 0 : i32
    return %arg0, %c0_i32, %c0_i32_0, %c0_i32_1 : i32, i32, i32, i32
  }
  func.func @transform_2(%arg0: i32, %arg1: i32) -> (i32, i32, i32, i32) {
    %c0_i32 = arith.constant 0 : i32
    %c0_i32_0 = arith.constant 0 : i32
    %c0_i32_1 = arith.constant 0 : i32
    %c0_i32_2 = arith.constant 0 : i32
    return %arg0, %c0_i32, %c0_i32_0, %c0_i32_1 : i32, i32, i32, i32
  }
  func.func @transform_3(%arg0: i32, %arg1: i32) -> (i32, i32, i32, i32) {
    %c0_i32 = arith.constant 0 : i32
    %c0_i32_0 = arith.constant 0 : i32
    %c0_i32_1 = arith.constant 0 : i32
    return %arg0, %c0_i32, %arg1, %c0_i32_0 : i32, i32, i32, i32
  }
  func.func @transform_4(%arg0: i32, %arg1: i32) -> (i32, i32, i32, i32) {
    %c0_i32 = arith.constant 0 : i32
    %c0_i32_0 = arith.constant 0 : i32
    %c0_i32_1 = arith.constant 0 : i32
    return %arg0, %c0_i32, %arg1, %c0_i32_0 : i32, i32, i32, i32
  }
}

</mosaic_0001>

<llo_original>
// kernel: cbn_forward.1
$region0: #{cbn_forward.1}
  #allocation0 [shape = 'u32[]', space=smem, size = 0x4, offset = 0x4, fixed_abs, tag = 'smem constant byte address 0x4 - core index']
  #allocation1 [shape = 'u32[144,128]{1,0:T(1,128)}', space=vmem, size = 0x12000, scoped, tag = 'internal scratch']
  %s0 = inlined_call_operand.vmem [shape: f32[2], index: 0, kind: input, shape index: {}]
  %s1 = inlined_call_operand.vmem [shape: f32[2,4,1,1], index: 1, kind: input, shape index: {}]
  %s2 = inlined_call_operand.vmem [shape: f32[2,4,1,1], index: 2, kind: input, shape index: {}]
  %s3 = inlined_call_operand.vmem [shape: f32[2,4,2,128], index: 3, kind: input, shape index: {}]
  %s4 = inlined_call_operand.vmem [shape: f32[2,4,2,128], index: 4, kind: output, shape index: {}]
  %s5 = sld [smem:[#allocation0]]
  $region53: #{cbn_forward.1} parent=0
    _
  %s7 = ssub.s32 1, %s5
  %s8 = scalar_select 0, %s7, %s5
  $region1: #{cbn_forward.1} parent=0
    #allocation2 [shape = 'u8[512]{0}', space=smem, size = 0x200, scoped, tag = 'input window, operand 0, single buffered']
    #allocation3 [shape = 's32[2]{0}', space=sflag, size = 0x8, scoped, tag = 'scoped memory for cbn_forward.1']
    %9 = vsyncpa [#allocation3], 0
    loop: start=0, step=1, limit=4
    $region2: #{cbn_forward.1} parent=1 // loop_pre_header
      _
    $region3: #{cbn_forward.1} parent=1 // loop_header
      %s11 = sphi 0, %s15
      %p12 = scmp.ge.s32.totalorder %s11, 4
      %s18 = sphi 0, %s30
      %s19 = sphi 0, %s26
      %s20 = sphi 0, %s18
      %s21 = sphi 0, %s19
      %s22 = sphi 0, %s20
      %s23 = sphi 0, %s21
      %s31 = sphi 0, %s31
      %s33 = sphi 0, %s31
      %s34 = sphi 0, %s33
      %s48 = sphi 0, %s34
      %s54 = sphi 0, %s56
      %s57 = sphi 0, %s54
      %s58 = sphi 0, %s57
      %s74 = sphi 0, %s58
      %s80 = sphi 0, %s82
      %s83 = sphi 0, %s80
      %s84 = sphi 0, %s83
      %s100 = sphi 0, %s84
      %s108 = sphi 0, %s110
      %s111 = sphi 0, %s108
      %s112 = sphi 0, %s111
      %s128 = sphi 0, %s112
      %s136 = sphi 0, %s138
      %s139 = sphi 0, %s136
      %s140 = sphi 0, %s139
      %s156 = sphi 0, %s140
    $region4: #{cbn_forward.1} parent=1 // loop_header_branch
      %14 = sbr.rel (%p12) target = $region8
    $region5: #{cbn_forward.1} parent=1 // loop_body
      %s16 = ssub.s32 %s11, 1
      %s17 = ssub.s32 %s11, 2
      %s24 = sadd.s32 1, %s19
      %p25 = scmp.ge.s32.totalorder %s24, 1
      %s26 = scalar_select %p25, 0, %s24
      %s27 = sadd.s32 1, %s18
      %s28 = scalar_select %p25, %s27, %s18
      %p29 = scmp.ge.s32.totalorder %s28, 2
      %s30 = scalar_select %p29, 0, %s28
      %s32 = sadd.s32 %s31, 1
      %p35 = scmp.eq.s32.totalorder %s11, 1
      %p36 = scmp.ne.s32.totalorder %s31, %s33
      %p37 = scmp.eq.s32.totalorder %s11, 0
      %p38 = por %p36, %p37
      %p39 = scmp.ne.s32.totalorder %s31, %s33
      %p40 = scmp.eq.s32.totalorder %s16, 1
      %p41 = por %p39, %p40
      %p42 = scmp.ne.s32.totalorder %s33, %s34
      %p43 = scmp.eq.s32.totalorder %s16, 0
      %p44 = por %p42, %p43
      %p45 = scmp.ne.s32.totalorder %s33, %s34
      %p46 = scmp.eq.s32.totalorder %s17, 1
      %p47 = por %p45, %p46
      %p49 = scmp.ne.s32.totalorder %s34, %s48
      %p50 = scmp.eq.s32.totalorder %s17, 0
      %p51 = por %p49, %p50
      %s52 = ssub.s32 %s18, %s30
      %p53 = scmp.eq.s32.totalorder %s52, 0
      %s55 = sadd.s32 %s54, 1
      %s56 = scalar_select %p53, %s54, %s55
      %p59 = pneg %p53
      %p60 = scmp.eq.s32.totalorder %s11, 1
      %p61 = por %p59, %p60
      %p62 = scmp.ne.s32.totalorder %s54, %s57
      %p63 = scmp.eq.s32.totalorder %s11, 0
      %p64 = por %p62, %p63
      %p65 = scmp.ne.s32.totalorder %s54, %s57
      %p66 = scmp.eq.s32.totalorder %s16, 1
      %p67 = por %p65, %p66
      %p68 = scmp.ne.s32.totalorder %s57, %s58
      %p69 = scmp.eq.s32.totalorder %s16, 0
      %p70 = por %p68, %p69
      %p71 = scmp.ne.s32.totalorder %s57, %s58
      %p72 = scmp.eq.s32.totalorder %s17, 1
      %p73 = por %p71, %p72
      %p75 = scmp.ne.s32.totalorder %s58, %s74
      %p76 = scmp.eq.s32.totalorder %s17, 0
      %p77 = por %p75, %p76
      %s78 = ssub.s32 %s18, %s30
      %p79 = scmp.eq.s32.totalorder %s78, 0
      %s81 = sadd.s32 %s80, 1
      %s82 = scalar_select %p79, %s80, %s81
      %p85 = pneg %p79
      %p86 = scmp.eq.s32.totalorder %s11, 1
      %p87 = por %p85, %p86
      %p88 = scmp.ne.s32.totalorder %s80, %s83
      %p89 = scmp.eq.s32.totalorder %s11, 0
      %p90 = por %p88, %p89
      %p91 = scmp.ne.s32.totalorder %s80, %s83
      %p92 = scmp.eq.s32.totalorder %s16, 1
      %p93 = por %p91, %p92
      %p94 = scmp.ne.s32.totalorder %s83, %s84
      %p95 = scmp.eq.s32.totalorder %s16, 0
      %p96 = por %p94, %p95
      %p97 = scmp.ne.s32.totalorder %s83, %s84
      %p98 = scmp.eq.s32.totalorder %s17, 1
      %p99 = por %p97, %p98
      %p101 = scmp.ne.s32.totalorder %s84, %s100
      %p102 = scmp.eq.s32.totalorder %s17, 0
      %p103 = por %p101, %p102
      %s104 = ssub.s32 %s18, %s30
      %s105 = ssub.s32 %s19, %s26
      %s106 = sor.u32 %s104, %s105
      %p107 = scmp.eq.s32.totalorder %s106, 0
      %s109 = sadd.s32 %s108, 1
      %s110 = scalar_select %p107, %s108, %s109
      %p113 = pneg %p107
      %p114 = scmp.eq.s32.totalorder %s11, 1
      %p115 = por %p113, %p114
      %p116 = scmp.ne.s32.totalorder %s108, %s111
      %p117 = scmp.eq.s32.totalorder %s11, 0
      %p118 = por %p116, %p117
      %p119 = scmp.ne.s32.totalorder %s108, %s111
      %p120 = scmp.eq.s32.totalorder %s16, 1
      %p121 = por %p119, %p120
      %p122 = scmp.ne.s32.totalorder %s111, %s112
      %p123 = scmp.eq.s32.totalorder %s16, 0
      %p124 = por %p122, %p123
      %p125 = scmp.ne.s32.totalorder %s111, %s112
      %p126 = scmp.eq.s32.totalorder %s17, 1
      %p127 = por %p125, %p126
      %p129 = scmp.ne.s32.totalorder %s112, %s128
      %p130 = scmp.eq.s32.totalorder %s17, 0
      %p131 = por %p129, %p130
      %s132 = ssub.s32 %s18, %s30
      %s133 = ssub.s32 %s19, %s26
      %s134 = sor.u32 %s132, %s133
      %p135 = scmp.eq.s32.totalorder %s134, 0
      %s137 = sadd.s32 %s136, 1
      %s138 = scalar_select %p135, %s136, %s137
      %p141 = pneg %p135
      %p142 = scmp.eq.s32.totalorder %s11, 1
      %p143 = por %p141, %p142
      %p144 = scmp.ne.s32.totalorder %s136, %s139
      %p145 = scmp.eq.s32.totalorder %s11, 0
      %p146 = por %p144, %p145
      %p147 = scmp.ne.s32.totalorder %s136, %s139
      %p148 = scmp.eq.s32.totalorder %s16, 1
      %p149 = por %p147, %p148
      %p150 = scmp.ne.s32.totalorder %s139, %s140
      %p151 = scmp.eq.s32.totalorder %s16, 0
      %p152 = por %p150, %p151
      %p153 = scmp.ne.s32.totalorder %s139, %s140
      %p154 = scmp.eq.s32.totalorder %s17, 1
      %p155 = por %p153, %p154
      %p157 = scmp.ne.s32.totalorder %s140, %s156
      %p158 = scmp.eq.s32.totalorder %s17, 0
      %p159 = por %p157, %p158
      %p160 = scmp.le.s32.totalorder 1, %s11
      %p161 = scmp.lt.s32.totalorder %s11, 3
      %p162 = pnand %p160, %p161
      %p163 = pneg %p162
      // Predicated region
      $region9: #{cbn_forward.1} parent=5 // pred_check
        _
      $region10: #{cbn_forward.1} parent=5 // pred_check_branch
        %165 = sbr.rel (%p162) target = $region12
      $region11: #{cbn_forward.1} parent=5 // pred_region
        %s166 = ssub.s32 %s11, 1
        // Predicated region
        $region13: #{cbn_forward.1} parent=11 // pred_check
          %p167 = pneg %p44
        $region14: #{cbn_forward.1} parent=11 // pred_check_branch
          %169 = sbr.rel (%p167) target = $region16
        $region15: #{cbn_forward.1} parent=11 // pred_region
          %s171 = ssub.s32 16, 16
          %172 = vsyncadd [#allocation3], %s171
          %s174 = sshll.u32 %s0, 4
          %s175 = int_to_ptr.vmem [resolvable:$true] %s174
          %177 = dma.vmem_to_smem %s175, 16, [#allocation2], [#allocation3]
        $region16: #{cbn_forward.1} parent=11 // pred_fallthru
          _
      $region12: #{cbn_forward.1} parent=5 // pred_fallthru
        _
      %p178 = scmp.lt.s32.totalorder %s11, 2
      // Predicated region
      $region17: #{cbn_forward.1} parent=5 // pred_check
        %p179 = pneg %p178
      $region18: #{cbn_forward.1} parent=5 // pred_check_branch
        %181 = sbr.rel (%p179) target = $region20
      $region19: #{cbn_forward.1} parent=5 // pred_region
        // Predicated region
        $region21: #{cbn_forward.1} parent=19 // pred_check
          %p182 = pneg %p64
        $region22: #{cbn_forward.1} parent=19 // pred_check_branch
          %184 = sbr.rel (%p182) target = $region24
        $region23: #{cbn_forward.1} parent=19 // pred_region
          %p185 = scmp.lt.s32.totalorder %s18, 1
          %s186 = scalar_select %p185, %s18, 1
          %s187 = smul.addr %s186, 4
          %s188 = scalar_lea.vmem %s1, %s187
        $region24: #{cbn_forward.1} parent=19 // pred_fallthru
          _
        // Predicated region
        $region25: #{cbn_forward.1} parent=19 // pred_check
          %p189 = pneg %p90
        $region26: #{cbn_forward.1} parent=19 // pred_check_branch
          %191 = sbr.rel (%p189) target = $region28
        $region27: #{cbn_forward.1} parent=19 // pred_region
          %p192 = scmp.lt.s32.totalorder %s18, 1
          %s193 = scalar_select %p192, %s18, 1
          %s194 = smul.addr %s193, 4
          %s195 = scalar_lea.vmem %s2, %s194
        $region28: #{cbn_forward.1} parent=19 // pred_fallthru
          _
        // Predicated region
        $region29: #{cbn_forward.1} parent=19 // pred_check
          %p196 = pneg %p118
        $region30: #{cbn_forward.1} parent=19 // pred_check_branch
          %198 = sbr.rel (%p196) target = $region32
        $region31: #{cbn_forward.1} parent=19 // pred_region
          %p199 = scmp.lt.s32.totalorder %s18, 1
          %s200 = scalar_select %p199, %s18, 1
          %p201 = scmp.lt.s32.totalorder %s19, 0
          %s202 = scalar_select %p201, %s19, 0
          %s203 = smul.addr %s200, 4
          %s204 = sadd.s32 %s202, %s203
          %s205 = smul.addr %s204, 2
          %s206 = scalar_lea.vmem %s3, %s205
        $region32: #{cbn_forward.1} parent=19 // pred_fallthru
          _
      $region20: #{cbn_forward.1} parent=5 // pred_fallthru
        _
      %p207 = scmp.le.s32.totalorder 1, %s11
      %p208 = scmp.lt.s32.totalorder %s11, 3
      %p209 = pnand %p207, %p208
      %p210 = pneg %p209
      // Predicated region
      $region33: #{cbn_forward.1} parent=5 // pred_check
        _
      $region34: #{cbn_forward.1} parent=5 // pred_check_branch
        %212 = sbr.rel (%p209) target = $region36
      $region35: #{cbn_forward.1} parent=5 // pred_region
        %s213 = ssub.s32 %s11, 1
        // Predicated region
        $region37: #{cbn_forward.1} parent=35 // pred_check
          %p214 = pneg %p44
        $region38: #{cbn_forward.1} parent=35 // pred_check_branch
          %216 = sbr.rel (%p214) target = $region40
        $region39: #{cbn_forward.1} parent=35 // pred_region
          %217 = dma.done [#allocation3], 16
        $region40: #{cbn_forward.1} parent=35 // pred_fallthru
          _
        %218 = sfence
        %p219 = pneg %p44
        %p220 = pneg %p41
        %p221 = scmp.lt.s32.totalorder %s20, 1
        %s222 = scalar_select %p221, %s20, 1
        %s223 = smul.addr %s222, 4
        %s224 = scalar_lea.vmem %s1, %s223
        %p225 = pneg %p70
        %p226 = pneg %p67
        %p227 = scmp.lt.s32.totalorder %s20, 1
        %s228 = scalar_select %p227, %s20, 1
        %s229 = smul.addr %s228, 4
        %s230 = scalar_lea.vmem %s2, %s229
        %p231 = pneg %p96
        %p232 = pneg %p93
        %p233 = scmp.lt.s32.totalorder %s20, 1
        %s234 = scalar_select %p233, %s20, 1
        %p235 = scmp.lt.s32.totalorder %s21, 0
        %s236 = scalar_select %p235, %s21, 0
        %s237 = smul.addr %s234, 4
        %s238 = sadd.s32 %s236, %s237
        %s239 = smul.addr %s238, 2
        %s240 = scalar_lea.vmem %s3, %s239
        %p241 = pneg %p124
        %p242 = pneg %p121
        %p243 = pneg %p152
        %p244 = pneg %p149
        %p245 = scmp.lt.s32.totalorder %s20, 1
        %s246 = scalar_select %p245, %s20, 1
        %p247 = scmp.lt.s32.totalorder %s21, 0
        %s248 = scalar_select %p247, %s21, 0
        %s249 = smul.addr %s246, 4
        %s250 = sadd.s32 %s248, %s249
        %s251 = smul.addr %s250, 2
        %s252 = scalar_lea.vmem %s4, %s251
        %p253 = scmp.lt.s32.totalorder %s20, 1
        %s254 = scalar_select %p253, %s20, 1
        %s255 = smul.addr %s254, 4
        %s256 = scalar_lea.vmem %s1, %s255
        %p257 = scmp.lt.s32.totalorder %s20, 1
        %s258 = scalar_select %p257, %s20, 1
        %s259 = smul.addr %s258, 4
        %s260 = scalar_lea.vmem %s2, %s259
        %p261 = scmp.lt.s32.totalorder %s20, 1
        %s262 = scalar_select %p261, %s20, 1
        %p263 = scmp.lt.s32.totalorder %s21, 0
        %s264 = scalar_select %p263, %s21, 0
        %s265 = smul.addr %s262, 4
        %s266 = sadd.s32 %s264, %s265
        %s267 = smul.addr %s266, 2
        %s268 = scalar_lea.vmem %s3, %s267
        %p269 = scmp.lt.s32.totalorder %s20, 1
        %s270 = scalar_select %p269, %s20, 1
        %p271 = scmp.lt.s32.totalorder %s21, 0
        %s272 = scalar_select %p271, %s21, 0
        %s273 = smul.addr %s270, 4
        %s274 = sadd.s32 %s272, %s273
        %s275 = smul.addr %s274, 2
        %s276 = scalar_lea.vmem %s4, %s275
        %s277 = sld [smem:[#allocation2]]
        %s278 = sld [smem:[#allocation2 + $0x1]]
        %v279 = vld [vmem:[%s268] sm:$0x3]
        %v280 = vld [vmem:[%s268 + $0x2] sm:$0x3]
        %v281 = vld [vmem:[%s268 + $0x4] sm:$0x3]
        %v282 = vld [vmem:[%s268 + $0x6] sm:$0x3]
        %v283 = vstv %s277
        %v284 = vsub.f32 %v279, %v283
        %v285 = vsub.f32 %v280, %v283
        %v286 = vsub.f32 %v281, %v283
        %v287 = vsub.f32 %v282, %v283
        %v288 = vstv %s278
        %v289 = vmul.f32 %v284, %v288
        %v290 = vmul.f32 %v285, %v288
        %v291 = vmul.f32 %v286, %v288
        %v292 = vmul.f32 %v287, %v288
        %v293 = vld [vmem:[%s260] sm:$0x1]
        %v294 = vld [vmem:[%s260 + $0x1] sm:$0x1]
        %v295 = vld [vmem:[%s260 + $0x2] sm:$0x1]
        %v296 = vld [vmem:[%s260 + $0x3] sm:$0x1]
        %v301 = vlaneseq
        %v302 = vshrl.u32 %v301, 7
        %v303 = vsub.s32 0, %v302
        %v304 = vrot.slane %v293, %v303
        %v305 = vlaneseq
        %v306 = vshrl.u32 %v305, 7
        %v307 = vsub.s32 0, %v306
        %v308 = vrot.slane %v294, %v307
        %v309 = vlaneseq
        %v310 = vshrl.u32 %v309, 7
        %v311 = vsub.s32 0, %v310
        %v312 = vrot.slane %v295, %v311
        %v313 = vlaneseq
        %v314 = vshrl.u32 %v313, 7
        %v315 = vsub.s32 0, %v314
        %v316 = vrot.slane %v296, %v315
        %317 = vset.pattern.permute.xlu0 0
        %318 = vperm.xlu0 %317, %v304
        %v319 = vpop.permute.xlu0 %318
        %321 = vset.pattern.permute.xlu0 0
        %322 = vperm.xlu0 %321, %v308
        %v323 = vpop.permute.xlu0 %322
        %325 = vset.pattern.permute.xlu0 0
        %326 = vperm.xlu0 %325, %v312
        %v327 = vpop.permute.xlu0 %326
        %329 = vset.pattern.permute.xlu0 0
        %330 = vperm.xlu0 %329, %v316
        %v331 = vpop.permute.xlu0 %330
        %v333 = vmul.f32 %v289, %v319
        %v334 = vmul.f32 %v290, %v323
        %v335 = vmul.f32 %v291, %v327
        %v336 = vmul.f32 %v292, %v331
        %v337 = vld [vmem:[%s256] sm:$0x1]
        %v338 = vld [vmem:[%s256 + $0x1] sm:$0x1]
        %v339 = vld [vmem:[%s256 + $0x2] sm:$0x1]
        %v340 = vld [vmem:[%s256 + $0x3] sm:$0x1]
        %v345 = vlaneseq
        %v346 = vshrl.u32 %v345, 7
        %v347 = vsub.s32 0, %v346
        %v348 = vrot.slane %v337, %v347
        %v349 = vlaneseq
        %v350 = vshrl.u32 %v349, 7
        %v351 = vsub.s32 0, %v350
        %v352 = vrot.slane %v338, %v351
        %v353 = vlaneseq
        %v354 = vshrl.u32 %v353, 7
        %v355 = vsub.s32 0, %v354
        %v356 = vrot.slane %v339, %v355
        %v357 = vlaneseq
        %v358 = vshrl.u32 %v357, 7
        %v359 = vsub.s32 0, %v358
        %v360 = vrot.slane %v340, %v359
        %361 = vset.pattern.permute.xlu0 0
        %362 = vperm.xlu0 %361, %v348
        %v363 = vpop.permute.xlu0 %362
        %365 = vset.pattern.permute.xlu0 0
        %366 = vperm.xlu0 %365, %v352
        %v367 = vpop.permute.xlu0 %366
        %369 = vset.pattern.permute.xlu0 0
        %370 = vperm.xlu0 %369, %v356
        %v371 = vpop.permute.xlu0 %370
        %373 = vset.pattern.permute.xlu0 0
        %374 = vperm.xlu0 %373, %v360
        %v375 = vpop.permute.xlu0 %374
        %v377 = vadd.f32 %v333, %v363
        %v378 = vadd.f32 %v334, %v367
        %v379 = vadd.f32 %v335, %v371
        %v380 = vadd.f32 %v336, %v375
        %vm381 = vcmask 1041408
        %v382 = vsel %vm381, %v377, -inf
        %v383 = vsel %vm381, %v378, -inf
        %v384 = vsel %vm381, %v379, -inf
        %v385 = vsel %vm381, %v380, -inf
        %v386 = vmax.f32 %v382, %v383
        %v387 = vmax.f32 %v384, %v385
        %v388 = vmax.f32 %v386, %v387
        %v389 = vsub.f32 %v377, %v388
        %v390 = vsub.f32 %v378, %v388
        %v391 = vsub.f32 %v379, %v388
        %v392 = vsub.f32 %v380, %v388
        %v393 = vmul.f32 %v389, 1.442695
        %v394 = vpow.pop %v393
        %v395 = vmul.f32 %v390, 1.442695
        %v396 = vpow.pop %v395
        %v397 = vmul.f32 %v391, 1.442695
        %v398 = vpow.pop %v397
        %v399 = vmul.f32 %v392, 1.442695
        %v400 = vpow.pop %v399
        %v401 = vsel %vm381, %v394, 0.0
        %v402 = vsel %vm381, %v396, 0.0
        %v403 = vadd.f32 %v401, %v402
        %v404 = vsel %vm381, %v398, 0.0
        %v405 = vadd.f32 %v403, %v404
        %v406 = vsel %vm381, %v400, 0.0
        %v407 = vadd.f32 %v405, %v406
        %v408 = vrcp.pop %v407
        %v409 = vmul.f32 %v407, %v408
        %v410 = vsub.f32 2.0, %v409
        %v411 = vmul.f32 %v408, %v410
        %v412 = vmul.f32 %v394, %v411
        %v413 = vmul.f32 %v396, %v411
        %v414 = vmul.f32 %v398, %v411
        %v415 = vmul.f32 %v400, %v411
        %v416 = vmul.f32 %v377, %v412
        %v417 = vmul.f32 %v378, %v413
        %v418 = vmul.f32 %v379, %v414
        %v419 = vmul.f32 %v380, %v415
        %420 = vst [vmem:[%s276] sm:$0x3] %v416
        %421 = vst [vmem:[%s276 + $0x2] sm:$0x3] %v417
        %422 = vst [vmem:[%s276 + $0x4] sm:$0x3] %v418
        %423 = vst [vmem:[%s276 + $0x6] sm:$0x3] %v419
        %p424 = scmp.lt.s32.totalorder %s20, 1
        %s425 = scalar_select %p424, %s20, 1
        %p426 = scmp.lt.s32.totalorder %s21, 0
        %s427 = scalar_select %p426, %s21, 0
        %s428 = smul.addr %s425, 4
        %s429 = sadd.s32 %s427, %s428
        %s430 = smul.addr %s429, 2
        %s431 = scalar_lea.vmem %s4, %s430
        // Predicated region
        $region41: #{cbn_forward.1} parent=35 // pred_check
          %p432 = pneg %p149
        $region42: #{cbn_forward.1} parent=35 // pred_check_branch
          %434 = sbr.rel (%p432) target = $region44
        $region43: #{cbn_forward.1} parent=35 // pred_region
          _
        $region44: #{cbn_forward.1} parent=35 // pred_fallthru
          _
      $region36: #{cbn_forward.1} parent=5 // pred_fallthru
        _
      %p435 = scmp.le.s32.totalorder 2, %s11
      // Predicated region
      $region45: #{cbn_forward.1} parent=5 // pred_check
        %p436 = pneg %p435
      $region46: #{cbn_forward.1} parent=5 // pred_check_branch
        %438 = sbr.rel (%p436) target = $region48
      $region47: #{cbn_forward.1} parent=5 // pred_region
        %s439 = ssub.s32 %s11, 2
        // Predicated region
        $region49: #{cbn_forward.1} parent=47 // pred_check
          %p440 = pneg %p155
        $region50: #{cbn_forward.1} parent=47 // pred_check_branch
          %442 = sbr.rel (%p440) target = $region52
        $region51: #{cbn_forward.1} parent=47 // pred_region
          %p443 = scmp.lt.s32.totalorder %s22, 1
          %s444 = scalar_select %p443, %s22, 1
          %p445 = scmp.lt.s32.totalorder %s23, 0
          %s446 = scalar_select %p445, %s23, 0
          %s447 = smul.addr %s444, 4
          %s448 = sadd.s32 %s446, %s447
          %s449 = smul.addr %s448, 2
          %s450 = scalar_lea.vmem %s4, %s449
        $region52: #{cbn_forward.1} parent=47 // pred_fallthru
          _
      $region48: #{cbn_forward.1} parent=5 // pred_fallthru
        _
    $region6: #{cbn_forward.1} parent=1 // loop_footer
      %s15 = sadd.s32 1, %s11
    $region7: #{cbn_forward.1} parent=1 // loop_footer_branch
      %10 = sbr.rel target = $region3
    $region8: #{cbn_forward.1} parent=1 // loop_exit
      _
    %451 = vsyncpa [#allocation3], 1
    %s452 = scalar_lea.sflag [#allocation3], 1
    %453 = vsyncpa %s452, 1

</llo_original>
